<compile_context>
chip_gen: v6e
topology: v6e:2x2x1
jax: 0.10.0
libtpu: 0.0.40
codegen_flags: <defaults>
</compile_context>

<pallas_src>
import jax
import jax.numpy as jnp
from jax import lax
from jax.experimental import pallas as pl
from jax.experimental.pallas import tpu as pltpu

EMB_DIM = 300
EMB_K = 304                        # 300 emb dims + ones column (folded bias) + pad to mult of 8
ONES_COL = EMB_DIM                 # index of the constant-1 column feeding the folded bias
NUM_FILTERS = 100
F_PAD = 128                        # filters padded to a full lane tile
KSIZES = (3, 4, 5)
N_TAPS = sum(KSIZES)               # 12 conv taps in total
FEAT_PAD = len(KSIZES) * F_PAD     # 384 pooled-feature lanes (lane-dense output)


# ----------------------------------------------------------------------------------
# pltpu.roll direction probe (cached, one tiny 8x128 kernel per process).
# We need "shift up": z[t] = y[t + j].  The probe makes the tap alignment robust
# regardless of the hardware rotate sign convention.
# ----------------------------------------------------------------------------------
_ROLL_IS_JNP = None   # True  -> pltpu.roll(x, s)[t] == x[t - s]   (jnp.roll semantics)
                      # False -> pltpu.roll(x, s)[t] == x[t + s]


def _probe_roll_direction():
    global _ROLL_IS_JNP
    if _ROLL_IS_JNP is not None:
        return

    def probe_kernel(x_ref, o_ref):
        o_ref[...] = pltpu.roll(x_ref[...], 1, 0)

    x = jnp.arange(8 * 128, dtype=jnp.float32).reshape(8, 128)
    out = pl.pallas_call(
        probe_kernel, out_shape=jax.ShapeDtypeStruct((8, 128), jnp.float32))(x)
    _ROLL_IS_JNP = bool(jnp.array_equal(out, jnp.roll(x, 1, axis=0)))


def _shift_up(y, j):
    """z[t] = y[(t + j) % n] along axis 0, on the XLU (free-ish next to MXU/VALU work)."""
    if j == 0:
        return y
    n = y.shape[0]
    return pltpu.roll(y, (n - j) if _ROLL_IS_JNP else j, 0)


# ----------------------------------------------------------------------------------
# Kernel
# ----------------------------------------------------------------------------------
def _make_kernel(louts):
    """louts[g] = L - KSIZES[g] + 1, computed from the ORIGINAL (unpadded) L."""

    def kernel(x_ref, w_ref, o_ref):
        two, tb, lp, ek = x_ref.shape             # (2, TB, Lp, 304): static rows, then non-static
        rows = two * tb * lp
        x2 = x_ref[...].reshape(rows, ek)         # (2*TB*Lp, 304) bf16

        pos = lax.broadcasted_iota(jnp.int32, (lp, F_PAD), 0)   # position within a sentence

        col = 0
        for g, ksz in enumerate(KSIZES):
            # One dot per conv-size group keeps the live f32 intermediate <= (rows, 640)
            # and lets the MXU work of group g+1 overlap this group's epilogue.
            wg = w_ref[:, col * F_PAD:(col + ksz) * F_PAD]       # (304, ksz*128) bf16
            yg = jnp.dot(x2, wg, preferred_element_type=jnp.float32)   # (rows, ksz*128) f32

            # Tap j=0 already carries the conv bias (ones column x bias row of w_big).
            acc = yg[:, :F_PAD]
            for j in range(1, ksz):
                # conv_k output at t needs x[t+j] @ W[j] -> shift tap-j rows up by j (XLU).
                acc = acc + _shift_up(yg[:, j * F_PAD:(j + 1) * F_PAD], j)
            col += ksz

            f = jnp.maximum(acc, 0.0).reshape(two, tb, lp, F_PAD)
            f = f[0] + f[1]                        # relu(static)+relu(non_static), per PyTorch
            # Positions t >= lout hold rolled-in garbage / length padding.  Masking with 0 is
            # safe because f = relu(.)+relu(.) >= 0, so the valid max is always >= 0.
            f = jnp.where(pos[None] < louts[g], f, 0.0)
            o_ref[:, g * F_PAD:(g + 1) * F_PAD] = jnp.max(f, axis=1)

    return kernel


# ----------------------------------------------------------------------------------
# One-time parameter packing (outside the per-batch path)
# ----------------------------------------------------------------------------------
def pack_params(params):
    """bf16 embedding tables, conv taps + folded bias packed into one lane-dense
    (304, 12*128) bf16 matrix, FC weight padded to the 384 pooled-feature lanes."""
    blocks = []
    for wname, bname in (("w3", "b3"), ("w4", "b4"), ("w5", "b5")):
        W = params[wname]                          # (k, 300, 100) f32
        b = params[bname]                          # (1, 100) f32
        for j in range(W.shape[0]):
            blk = jnp.zeros((EMB_K, F_PAD), jnp.float32)
            blk = blk.at[:EMB_DIM, :NUM_FILTERS].set(W[j])
            if j == 0:                             # bias rides on the ones column of tap j=0
                blk = blk.at[ONES_COL, :NUM_FILTERS].set(b[0])
            blocks.append(blk)
    w_big = jnp.concatenate(blocks, axis=1).astype(jnp.bfloat16)   # (304, 1536)

    fw = params["fc_w"].astype(jnp.float32)
    C = fw.shape[1]
    fw_pad = jnp.zeros((FEAT_PAD, C), jnp.float32)
    for g in range(len(KSIZES)):
        fw_pad = fw_pad.at[g * F_PAD:g * F_PAD + NUM_FILTERS].set(
            fw[g * NUM_FILTERS:(g + 1) * NUM_FILTERS])

    return dict(
        emb_static=params["emb_static"].astype(jnp.bfloat16),
        emb_non_static=params["emb_non_static"].astype(jnp.bfloat16),
        w_big=w_big, fw_pad=fw_pad, fc_b=params["fc_b"].astype(jnp.float32))


# ----------------------------------------------------------------------------------
# Tiling heuristic + wrapper
# ----------------------------------------------------------------------------------
def _round_up(x, m):
    return ((x + m - 1) // m) * m


def _pick_tiles(B, L):
    lp = _round_up(L, 16)                          # bf16-friendly sentence-length padding
    # Target ~768 rows (TB*Lp) per grid step -> stacked M ~1536 fills the 256-wide MXU and
    # amortizes the ~0.35 us per-step overhead.
    tb = _round_up(max(1, -(-768 // lp)), 8)
    tb = min(tb, _round_up(B, 8))
    bp = _round_up(B, tb)
    # v7x megacore: keep >= 2 grid steps whenever the batch allows it.
    if bp // tb < 2 and bp >= 16:
        tb = _round_up(bp // 2, 8)
        bp = _round_up(B, tb)
    return lp, tb, bp


def sentence_cnn_forward(x_tokens, packed, *, tb=None):
    """x_tokens: (B, L) int32 token ids.  packed: output of pack_params.
    Returns (B, num_classes) float32 scores (eval mode)."""
    B, L = x_tokens.shape
    if L < max(KSIZES):
        raise ValueError(f"sequence length {L} shorter than largest kernel size")

    _probe_roll_direction()

    lp, tb_auto, bp = _pick_tiles(B, L)
    if tb is None:
        tb = tb_auto
    else:
        tb = max(8, _round_up(min(tb, _round_up(B, 8)), 8))
        bp = _round_up(B, tb)

    # ---- glue (bf16 end-to-end): gather, stack static/non-static on M, pad, ones column ----
    sb = jnp.take(packed["emb_static"], x_tokens, axis=0)         # (B, L, 300) bf16
    nb = jnp.take(packed["emb_non_static"], x_tokens, axis=0)
    x = jnp.stack([sb, nb], axis=0)                               # (2, B, L, 300) bf16
    x = jnp.pad(x, ((0, 0), (0, bp - B), (0, lp - L), (0, EMB_K - EMB_DIM)))
    x = x.at[..., ONES_COL].set(1.0)                              # feeds the folded conv bias
    # TODO(synk): the gather could move inside the kernel (scalar-prefetched token ids +
    # manual DMA) so the (B, Lp, 300) activations never round-trip through HBM.

    louts = tuple(L - k + 1 for k in KSIZES)

    def call(buffered_weight):
        w_kwargs = {"pipeline_mode": pl.Buffered(1)} if buffered_weight else {}
        return pl.pallas_call(
            _make_kernel(louts),
            out_shape=jax.ShapeDtypeStruct((bp, FEAT_PAD), jnp.float32),
            grid_spec=pltpu.PrefetchScalarGridSpec(
                num_scalar_prefetch=0,
                grid=(bp // tb,),
                in_specs=[
                    pl.BlockSpec((2, tb, lp, EMB_K), lambda i: (0, i, 0, 0)),   # stacked embeddings
                    pl.BlockSpec((EMB_K, N_TAPS * F_PAD), lambda i: (0, 0),     # packed conv W (+bias)
                                 **w_kwargs),
                ],
                out_specs=pl.BlockSpec((tb, FEAT_PAD), lambda i: (i, 0)),
            ),
            compiler_params=pltpu.CompilerParams(
                dimension_semantics=("parallel",),
                # <= ~48 MiB: leaves headroom on v7x's 64 MiB per-core VMEM (128 MiB on v5e/v6e).
                vmem_limit_bytes=48 * 1024 * 1024),
        )(x, packed["w_big"])

    try:
        feats = call(True)       # constant weight: single buffer saves ~0.9 MiB VMEM (v7x)
    except Exception:            # pipeline_mode unsupported in this jax build -> default buffering
        feats = call(False)

    feats = feats[:B]                                             # drop batch padding

    # dropout == identity (eval).  FC once over the whole batch, in plain JAX.
    # Padded feature lanes are exactly zero and match zero rows in fw_pad.
    return feats @ packed["fw_pad"] + packed["fc_b"]


# ----------------------------------------------------------------------------------
# Params + pure-JAX reference (PyTorch forward, eval mode, f32)
# ----------------------------------------------------------------------------------
def init_params(key, vocab_size, num_classes):
    ks = jax.random.split(key, 10)
    emb = jax.random.normal(ks[0], (vocab_size, EMB_DIM), jnp.float32) * 0.1
    emb = emb.at[0].set(0.0)                       # padding_idx=0

    def conv_wb(kw, kb, ksz):
        fan_in = EMB_DIM * ksz
        bound = jnp.sqrt(6.0 / fan_in)
        w = jax.random.uniform(kw, (ksz, EMB_DIM, NUM_FILTERS), jnp.float32,
                               -bound, bound)
        b = jax.random.uniform(kb, (1, NUM_FILTERS), jnp.float32,
                               -1.0 / jnp.sqrt(fan_in), 1.0 / jnp.sqrt(fan_in))
        return w, b

    w3, b3 = conv_wb(ks[1], ks[2], 3)
    w4, b4 = conv_wb(ks[3], ks[4], 4)
    w5, b5 = conv_wb(ks[5], ks[6], 5)

    std = jnp.sqrt(2.0 / (3 * NUM_FILTERS + num_classes))
    fc_w = jax.random.normal(ks[7], (3 * NUM_FILTERS, num_classes), jnp.float32) * std
    fc_b = jax.random.uniform(ks[8], (1, num_classes), jnp.float32,
                              -1.0 / jnp.sqrt(3 * NUM_FILTERS),
                              1.0 / jnp.sqrt(3 * NUM_FILTERS))

    return dict(emb_static=emb, emb_non_static=emb,
                w3=w3, b3=b3, w4=w4, b4=b4, w5=w5, b5=b5,
                fc_w=fc_w, fc_b=fc_b)


def reference_forward(x_tokens, params):
    s = jnp.take(params["emb_static"], x_tokens, axis=0)          # (B, L, 300)
    n = jnp.take(params["emb_non_static"], x_tokens, axis=0)
    B, L, _ = s.shape
    feats = []
    for W, b in ((params["w3"], params["b3"]),
                 (params["w4"], params["b4"]),
                 (params["w5"], params["b5"])):
        k = W.shape[0]
        lout = L - k + 1

        def conv_relu(e):
            acc = jnp.zeros((B, lout, NUM_FILTERS), jnp.float32) + b
            for j in range(k):
                acc = acc + jnp.einsum('ble,eo->blo', e[:, j:j + lout, :], W[j])
            return jax.nn.relu(acc)

        f = conv_relu(s) + conv_relu(n)
        feats.append(jnp.max(f, axis=1))
    feature = jnp.concatenate(feats, axis=1)
    return feature @ params["fc_w"] + params["fc_b"][0]


if __name__ == "__main__":
    key = jax.random.PRNGKey(0)
    vocab_size, num_classes = 50, 3
    B, L = 16, 16

    pkey, xkey = jax.random.split(key)
    params = init_params(pkey, vocab_size, num_classes)
    packed = pack_params(params)
    x = jax.random.randint(xkey, (B, L), 0, vocab_size, dtype=jnp.int32)

    out = sentence_cnn_forward(x, packed)          # auto tiling -> 2 grid steps at B=16
    out = jax.block_until_ready(out)

    ref = reference_forward(x, params)
    assert out.shape == (B, num_classes)
    # bf16 MXU inputs inside the kernel vs a pure-f32 reference -> loose tolerance.
    assert jnp.allclose(out, ref, atol=3e-2, rtol=3e-2), (out, ref)
    print("KERNEL_OK")
</pallas_src>

<mosaic_0001>
module attributes {stable_mosaic.version = 11 : i64} {
  func.func @probe_kernel(%arg0: memref<8x128xf32, #tpu.memory_space<vmem>>, %arg1: memref<8x128xf32, #tpu.memory_space<vmem>>) attributes {dimension_semantics = [], scalar_prefetch = 0 : i64, scratch_operands = 0 : i64, tpu.core_type = #tpu.core_type<tc>} {
    %c0 = arith.constant 0 : index
    %c0_0 = arith.constant 0 : index
    %0 = vector.load %arg0[%c0, %c0_0] : memref<8x128xf32, #tpu.memory_space<vmem>>, vector<8x128xf32>
    %c1_i32 = arith.constant 1 : i32
    %1 = tpu.dynamic_rotate %0 by %c1_i32 dim 0 : vector<8x128xf32>, i32 -> vector<8x128xf32>
    %c0_1 = arith.constant 0 : index
    %c0_2 = arith.constant 0 : index
    %2 = vector.load %arg1[%c0_1, %c0_2] : memref<8x128xf32, #tpu.memory_space<vmem>>, vector<8x128xf32>
    tpu.vector_store %arg1[%c0_1, %c0_2], %1 {strides = array<i32>} : memref<8x128xf32, #tpu.memory_space<vmem>>, vector<8x128xf32>,
    return
  }
}

</mosaic_0001>

<llo_original>
// kernel: tpu_custom_call.1
$region0: #{tpu_custom_call.1}
  #allocation0 [shape = 'u32[]', space=smem, size = 0x4, offset = 0x4, fixed_abs, tag = 'smem constant byte address 0x4 - core index']
  #allocation1 [shape = 'u32[144,128]{1,0:T(1,128)}', space=vmem, size = 0x12000, scoped, tag = 'internal scratch']
  %s0 = inlined_call_operand.hbm [shape: f32[8,128], index: 0, kind: input, shape index: {}]
  %s1 = inlined_call_operand.hbm [shape: f32[8,128], index: 1, kind: output, shape index: {}]
  %s2 = sld [smem:[#allocation0]]
  $region18: #{tpu_custom_call.1} parent=0
    _
  %s4 = ssub.s32 1, %s2
  %s5 = scalar_select 0, %s4, %s2
  $region1: #{tpu_custom_call.1} parent=0
    #allocation2 [shape = 'u8[4096]{0}', space=vmem, size = 0x1000, scoped, tag = 'input window, operand 0, single buffered']
    #allocation3 [shape = 's32[1]{0}', space=sflag, size = 0x4, scoped, tag = 'scoped memory for tpu_custom_call.1']
    #allocation4 [shape = 's32[1]{0}', space=sflag, size = 0x4, scoped, tag = 'scoped memory for tpu_custom_call.1']
    #allocation5 [shape = 'u8[4096]{0}', space=vmem, size = 0x1000, scoped, tag = 'output window, operand 0, single buffered']
    %6 = vsyncpa [#allocation3], 0
    %7 = vsyncpa [#allocation4], 0
    // Predicated region
    $region2: #{tpu_custom_call.1} parent=1 // pred_check
      _
    $region3: #{tpu_custom_call.1} parent=1 // pred_check_branch
      %9 = sbr.rel (0) target = $region5
    $region4: #{tpu_custom_call.1} parent=1 // pred_region
      %s11 = ssub.s32 128, 128
      %12 = vsyncadd [#allocation3], %s11
      %s14 = sshll.u32 [#allocation2], 4
      %s15 = int_to_ptr.vmem [resolvable:$true] %s14
      %17 = dma.hbm_to_vmem [thread:$0]  %s0, 128, %s15, [#allocation3]
    $region5: #{tpu_custom_call.1} parent=1 // pred_fallthru
      _
    // Predicated region
    $region6: #{tpu_custom_call.1} parent=1 // pred_check
      _
    $region7: #{tpu_custom_call.1} parent=1 // pred_check_branch
      %19 = sbr.rel (0) target = $region9
    $region8: #{tpu_custom_call.1} parent=1 // pred_region
      %20 = dma.done [#allocation3], 128
    $region9: #{tpu_custom_call.1} parent=1 // pred_fallthru
      _
    %v21 = vld [vmem:[#allocation2] sm:$0xff]
    %v22 = vrot.slane %v21, 7
    %23 = vst [vmem:[#allocation5] sm:$0xff] %v22
    // Predicated region
    $region10: #{tpu_custom_call.1} parent=1 // pred_check
      _
    $region11: #{tpu_custom_call.1} parent=1 // pred_check_branch
      %25 = sbr.rel (0) target = $region13
    $region12: #{tpu_custom_call.1} parent=1 // pred_region
      %s27 = ssub.s32 128, 128
      %28 = vsyncadd [#allocation4], %s27
      %s30 = sshll.u32 [#allocation5], 4
      %s31 = int_to_ptr.vmem [resolvable:$true] %s30
      %33 = dma.vmem_to_hbm [thread:$0]  %s31, 128, %s1, [#allocation4]
    $region13: #{tpu_custom_call.1} parent=1 // pred_fallthru
      _
    // Predicated region
    $region14: #{tpu_custom_call.1} parent=1 // pred_check
      _
    $region15: #{tpu_custom_call.1} parent=1 // pred_check_branch
      %35 = sbr.rel (0) target = $region17
    $region16: #{tpu_custom_call.1} parent=1 // pred_region
      %36 = dma.done [#allocation4], 128
    $region17: #{tpu_custom_call.1} parent=1 // pred_fallthru
      _
    %37 = vsyncpa [#allocation3], 1
    %38 = vsyncpa [#allocation4], 1

</llo_original>
